<compile_context>
chip_gen: v5e
topology: v5e:2x2
jax: 0.10.0
libtpu: 0.0.40
codegen_flags: <defaults>
</compile_context>

<pallas_src>
import functools

import jax
import jax.numpy as jnp
from jax import lax
from jax.experimental import pallas as pl
from jax.experimental.pallas import tpu as pltpu

BN_EPS = 1e-5
LANE = 128
TM_MAX = 512


def _round_up(x, m):
    return (x + m - 1) // m * m


def _pick_tile(m):
    """Row tile (multiple of 16 for bf16 sublane packing) and padded M."""
    tm = TM_MAX if m >= TM_MAX else _round_up(m, 16)
    return tm, _round_up(m, tm)


# ----------------------------------------------------------------------------
# Pallas kernels
# ----------------------------------------------------------------------------
def _conv_matmul_kernel(p_ref, w_ref, o_ref, stats_ref):
    """One (tm, K) x (K, Cp) bf16 matmul per grid step, f32 accumulate.

    Also emits per-tile per-channel sum / sum-of-squares (rows 0/1 of an
    (8, Cp) slab) so BatchNorm batch statistics can be reduced cheaply outside
    without re-reading the (M, Cp) output from HBM.
    """
    y = jnp.dot(p_ref[...], w_ref[...], preferred_element_type=jnp.float32)
    o_ref[...] = y
    s = jnp.sum(y, axis=0, keepdims=True)
    sq = jnp.sum(y * y, axis=0, keepdims=True)
    rows = lax.broadcasted_iota(jnp.int32, (8, y.shape[1]), 0)
    stats_ref[...] = jnp.where(rows == 0, s, jnp.where(rows == 1, sq, 0.0))


def _affine_act_kernel(y_ref, s_ref, b_ref, o_ref, *, relu):
    """out = y*scale + shift (folded BN or bias), optional ReLU."""
    out = y_ref[...] * s_ref[...] + b_ref[...]
    if relu:
        out = jnp.maximum(out, 0.0)
    o_ref[...] = out


def _affine_res_act_kernel(y_ref, s_ref, b_ref, r_ref, rs_ref, rb_ref, o_ref, *, relu):
    """out = (y*scale + shift) + (res*res_scale + res_shift), optional ReLU.

    Fuses the residual add (and the shortcut branch's folded BN) into the
    epilogue of the second conv of a BasicBlock.
    """
    out = (y_ref[...] * s_ref[...] + b_ref[...]
           + r_ref[...] * rs_ref[...] + rb_ref[...])
    if relu:
        out = jnp.maximum(out, 0.0)
    o_ref[...] = out


def _gap_kernel(x_ref, o_ref, *, inv_count):
    """Global average pool: accumulate spatial sums, scale on the last step."""
    @pl.when(pl.program_id(0) == 0)
    def _():
        o_ref[...] = jnp.zeros_like(o_ref)

    o_ref[...] += jnp.sum(x_ref[...], axis=1)

    @pl.when(pl.program_id(0) == pl.num_programs(0) - 1)
    def _():
        o_ref[...] = o_ref[...] * inv_count


# ----------------------------------------------------------------------------
# Wrappers (patch extraction / padding / reshapes stay in plain JAX)
# ----------------------------------------------------------------------------
def conv2d_raw(x, w, *, stride=1, padding=0):
    """Raw conv (no BN/act).

    x: (N, H, W, Cstore) f32, channels possibly lane-padded; real Cin = w.shape[2].
    w: (KH, KW, Cin, Cout) f32.
    Returns (y_raw (Mp, Cp) f32, col_sum (Cp,), col_sq (Cp,), meta dict).
    """
    N, H, W, _ = x.shape
    KH, KW, Cin, Cout = w.shape
    Ho = (H + 2 * padding - KH) // stride + 1
    Wo = (W + 2 * padding - KW) // stride + 1
    M = N * Ho * Wo
    K = KH * KW * Cin
    Cp = _round_up(Cout, LANE)

    xs = x[..., :Cin]
    if padding:
        xs = jnp.pad(xs, ((0, 0), (padding, padding), (padding, padding), (0, 0)))

    # im2col with taps folded into the contraction axis: (M, KH*KW*Cin)
    taps = []
    for kh in range(KH):
        for kw in range(KW):
            s = xs[:, kh:kh + stride * Ho:stride, kw:kw + stride * Wo:stride, :]
            taps.append(s.reshape(M, Cin))
    patches = jnp.concatenate(taps, axis=-1)

    tm, Mp = _pick_tile(M)
    if Mp != M:
        patches = jnp.pad(patches, ((0, Mp - M), (0, 0)))
    patches = patches.astype(jnp.bfloat16)

    wmat = w.reshape(K, Cout)
    if Cp != Cout:
        wmat = jnp.pad(wmat, ((0, 0), (0, Cp - Cout)))
    wmat = wmat.astype(jnp.bfloat16)

    ntiles = Mp // tm
    y, stats = pl.pallas_call(
        _conv_matmul_kernel,
        out_shape=(jax.ShapeDtypeStruct((Mp, Cp), jnp.float32),
                   jax.ShapeDtypeStruct((ntiles * 8, Cp), jnp.float32)),
        grid=(ntiles,),
        in_specs=[
            pl.BlockSpec((tm, K), lambda i: (i, 0)),
            pl.BlockSpec((K, Cp), lambda i: (0, 0)),
        ],
        out_specs=(
            pl.BlockSpec((tm, Cp), lambda i: (i, 0)),
            pl.BlockSpec((8, Cp), lambda i: (i, 0)),
        ),
        compiler_params=pltpu.CompilerParams(dimension_semantics=("parallel",)),
    )(patches, wmat)

    stats = stats.reshape(ntiles, 8, Cp)
    col_sum = jnp.sum(stats[:, 0, :], axis=0)
    col_sq = jnp.sum(stats[:, 1, :], axis=0)
    meta = dict(N=N, Ho=Ho, Wo=Wo, M=M, Mp=Mp, tm=tm, Cout=Cout, Cp=Cp)
    return y, col_sum, col_sq, meta


def bn_fold(col_sum, col_sq, m_real, gamma, beta, cp):
    """Fold batch-stat BN into per-channel scale/shift (biased var, eps=1e-5)."""
    mean = col_sum / float(m_real)
    var = jnp.maximum(col_sq / float(m_real) - mean * mean, 0.0)
    g = jnp.pad(gamma.astype(jnp.float32), (0, cp - gamma.shape[0]), constant_values=1.0)
    b = jnp.pad(beta.astype(jnp.float32), (0, cp - beta.shape[0]))
    scale = g * lax.rsqrt(var + BN_EPS)
    shift = b - mean * scale
    return scale, shift


def affine_act(y, scale, shift, *, relu, tm, res=None, rscale=None, rshift=None):
    """Apply per-channel scale/shift (+ optional residual branch) + optional ReLU."""
    Mp, Cp = y.shape
    ntiles = Mp // tm
    row_spec = pl.BlockSpec((tm, Cp), lambda i: (i, 0))
    vec_spec = pl.BlockSpec((1, Cp), lambda i: (0, 0))
    scale = scale.reshape(1, Cp).astype(jnp.float32)
    shift = shift.reshape(1, Cp).astype(jnp.float32)

    if res is None:
        kernel = functools.partial(_affine_act_kernel, relu=relu)
        operands = (y, scale, shift)
        in_specs = [row_spec, vec_spec, vec_spec]
    else:
        kernel = functools.partial(_affine_res_act_kernel, relu=relu)
        operands = (y, scale, shift, res,
                    rscale.reshape(1, Cp).astype(jnp.float32),
                    rshift.reshape(1, Cp).astype(jnp.float32))
        in_specs = [row_spec, vec_spec, vec_spec, row_spec, vec_spec, vec_spec]

    return pl.pallas_call(
        kernel,
        out_shape=jax.ShapeDtypeStruct((Mp, Cp), jnp.float32),
        grid=(ntiles,),
        in_specs=in_specs,
        out_specs=row_spec,
        compiler_params=pltpu.CompilerParams(dimension_semantics=("parallel",)),
    )(*operands)


def conv_bn_relu(x, w, gamma, beta, *, stride, padding):
    """conv -> BN(batch stats) -> ReLU, returned as (N, Ho, Wo, Cp)."""
    y, cs, cq, m = conv2d_raw(x, w, stride=stride, padding=padding)
    scale, shift = bn_fold(cs, cq, m['M'], gamma, beta, m['Cp'])
    out = affine_act(y, scale, shift, relu=True, tm=m['tm'])
    return out[:m['M']].reshape(m['N'], m['Ho'], m['Wo'], m['Cp'])


def global_avg_pool(x):
    """(N, H, W, Cp) -> (N, Cp)  (AdaptiveAvgPool2d(1) + flatten)."""
    N, H, W, Cp = x.shape
    HW = H * W
    thw = min(256, _round_up(HW, 8))
    HWp = _round_up(HW, thw)
    x2 = x.reshape(N, HW, Cp)
    if HWp != HW:
        x2 = jnp.pad(x2, ((0, 0), (0, HWp - HW), (0, 0)))
    kernel = functools.partial(_gap_kernel, inv_count=1.0 / float(HW))
    return pl.pallas_call(
        kernel,
        out_shape=jax.ShapeDtypeStruct((N, Cp), jnp.float32),
        grid=(HWp // thw,),
        in_specs=[pl.BlockSpec((N, thw, Cp), lambda t: (0, t, 0))],
        out_specs=pl.BlockSpec((N, Cp), lambda t: (0, 0)),
        compiler_params=pltpu.CompilerParams(dimension_semantics=("arbitrary",)),
    )(x2)


# ----------------------------------------------------------------------------
# Parameter init (deterministic, synthetic)
# ----------------------------------------------------------------------------
def _conv_w(key, kh, kw, cin, cout):
    fan_in = kh * kw * cin
    return jax.random.normal(key, (kh, kw, cin, cout), jnp.float32) / jnp.sqrt(float(fan_in))


def _bn_params(key, c):
    k1, k2 = jax.random.split(key)
    gamma = 1.0 + 0.1 * jax.random.normal(k1, (c,), jnp.float32)
    beta = 0.1 * jax.random.normal(k2, (c,), jnp.float32)
    return gamma, beta


def init_params(key, base_width=8, num_blocks=(1, 1, 1, 1), num_classes=10):
    keys = iter(jax.random.split(key, 128))
    p = {'conv1_w': _conv_w(next(keys), 3, 3, 3, base_width)}
    p['bn1_g'], p['bn1_b'] = _bn_params(next(keys), base_width)

    in_planes = base_width
    for li, (mult, nb, stride0) in enumerate(zip((1, 2, 4, 8), num_blocks, (1, 2, 2, 2)), start=1):
        planes = base_width * mult
        blocks = []
        for s in [stride0] + [1] * (nb - 1):
            bp = {'w1': _conv_w(next(keys), 3, 3, in_planes, planes)}
            bp['g1'], bp['b1'] = _bn_params(next(keys), planes)
            bp['w2'] = _conv_w(next(keys), 3, 3, planes, planes)
            bp['g2'], bp['b2'] = _bn_params(next(keys), planes)
            if s != 1 or in_planes != planes:
                bp['ws'] = _conv_w(next(keys), 1, 1, in_planes, planes)
                bp['gs'], bp['bs'] = _bn_params(next(keys), planes)
            blocks.append({'params': bp, 'stride': s})
            in_planes = planes
        p[f'layer{li}'] = blocks

    p['fc_w'] = _conv_w(next(keys), 1, 1, in_planes, num_classes)
    p['fc_b'] = 0.01 * jax.random.normal(next(keys), (num_classes,), jnp.float32)
    return p


# ----------------------------------------------------------------------------
# Forward pass (probe=False path of ResNet.forward)
# ----------------------------------------------------------------------------
def basic_block(x, bp, stride):
    # conv1 -> BN -> ReLU
    out1 = conv_bn_relu(x, bp['w1'], bp['g1'], bp['b1'], stride=stride, padding=1)

    # conv2 (raw) + folded BN params
    y2, cs2, cq2, m2 = conv2d_raw(out1, bp['w2'], stride=1, padding=1)
    sc2, sh2 = bn_fold(cs2, cq2, m2['M'], bp['g2'], bp['b2'], m2['Cp'])
    Cp = m2['Cp']

    # shortcut branch: either identity (scale=1, shift=0) or raw 1x1 conv whose
    # BN is folded into the same epilogue kernel as conv2's BN + add + ReLU.
    if 'ws' in bp:
        ys, css, cqs, ms = conv2d_raw(x, bp['ws'], stride=stride, padding=0)
        rsc, rsh = bn_fold(css, cqs, ms['M'], bp['gs'], bp['bs'], ms['Cp'])
        res = ys
    else:
        res = x.reshape(-1, x.shape[-1])[:, :Cp]
        if res.shape[0] != m2['Mp']:
            res = jnp.pad(res, ((0, m2['Mp'] - res.shape[0]), (0, 0)))
        rsc = jnp.ones((Cp,), jnp.float32)
        rsh = jnp.zeros((Cp,), jnp.float32)

    out = affine_act(y2, sc2, sh2, relu=True, tm=m2['tm'],
                     res=res, rscale=rsc, rshift=rsh)
    return out[:m2['M']].reshape(m2['N'], m2['Ho'], m2['Wo'], Cp)


def resnet_forward(params, x_nchw, num_classes=10):
    # layout: NCHW (PyTorch) -> NHWC so channels map to TPU lanes.
    x = jnp.transpose(x_nchw, (0, 2, 3, 1)).astype(jnp.float32)

    # conv1: pad Cin 3 -> 8 (sublane alignment) with zero channels/weights.
    x8 = jnp.pad(x, ((0, 0), (0, 0), (0, 0), (0, 8 - x.shape[-1])))
    w8 = jnp.pad(params['conv1_w'], ((0, 0), (0, 0), (0, 8 - params['conv1_w'].shape[2]), (0, 0)))
    out = conv_bn_relu(x8, w8, params['bn1_g'], params['bn1_b'], stride=1, padding=1)

    for li in range(1, 5):
        for blk in params[f'layer{li}']:
            out = basic_block(out, blk['params'], blk['stride'])

    pooled = global_avg_pool(out)                                # (N, Cp) == avgpool(1)
    N, Cp = pooled.shape

    # 1x1 conv "fc" with bias (no BN): bias folded into the affine epilogue.
    pooled4 = pooled.reshape(N, 1, 1, Cp)
    y, _, _, m = conv2d_raw(pooled4, params['fc_w'], stride=1, padding=0)
    scale = jnp.ones((m['Cp'],), jnp.float32)
    shift = jnp.pad(params['fc_b'], (0, m['Cp'] - params['fc_b'].shape[0]))
    logits = affine_act(y, scale, shift, relu=False, tm=m['tm'])
    return logits[:N, :num_classes]                              # out.flatten(1)


if __name__ == "__main__":
    key = jax.random.PRNGKey(0)
    pkey, xkey = jax.random.split(key)

    base_width = 8
    num_classes = 10
    params = init_params(pkey, base_width=base_width,
                         num_blocks=(1, 1, 1, 1), num_classes=num_classes)

    x = jax.random.normal(xkey, (2, 3, 16, 16), jnp.float32)     # NCHW, like PyTorch
    out = resnet_forward(params, x, num_classes=num_classes)
    out = jax.block_until_ready(out)
    assert out.shape == (2, num_classes) and out.dtype == jnp.float32
    assert bool(jnp.all(jnp.isfinite(out)))
    print("KERNEL_OK")
</pallas_src>

<mosaic_0001>
module attributes {stable_mosaic.version = 11 : i64} {
  func.func @_conv_matmul_kernel(%arg0: i32, %arg1: memref<512x72xbf16, #tpu.memory_space<vmem>>, %arg2: memref<72x128xbf16, #tpu.memory_space<vmem>>, %arg3: memref<512x128xf32, #tpu.memory_space<vmem>>, %arg4: memref<8x128xf32, #tpu.memory_space<vmem>>) attributes {dimension_semantics = [#tpu.dimension_semantics<parallel>], iteration_bounds = array<i64: 1>, scalar_prefetch = 0 : i64, scratch_operands = 0 : i64, tpu.core_type = #tpu.core_type<tc>, window_params = [{transform_indices = @transform_0, window_bounds = array<i64: 512, 72>}, {pipeline_mode = #tpu.pipeline_mode<synchronous>, transform_indices = @transform_1, window_bounds = array<i64: 72, 128>}, {transform_indices = @transform_2, window_bounds = array<i64: 512, 128>}, {transform_indices = @transform_3, window_bounds = array<i64: 8, 128>}]} {
    %c0 = arith.constant 0 : index
    %c0_0 = arith.constant 0 : index
    %0 = vector.load %arg1[%c0, %c0_0] : memref<512x72xbf16, #tpu.memory_space<vmem>>, vector<512x72xbf16>
    %c0_1 = arith.constant 0 : index
    %c0_2 = arith.constant 0 : index
    %1 = vector.load %arg2[%c0_1, %c0_2] : memref<72x128xbf16, #tpu.memory_space<vmem>>, vector<72x128xbf16>
    %cst = arith.constant dense<0.000000e+00> : vector<512x128xf32>
    %2 = tpu.matmul %0, %1, %cst {dimension_numbers = #tpu.dot_dimension_numbers<[1], [0], [0], [1], [0, 0, 1, 1], [], []>} : vector<512x72xbf16>, vector<72x128xbf16>, vector<512x128xf32> -> vector<512x128xf32>
    %c0_3 = arith.constant 0 : index
    %c0_4 = arith.constant 0 : index
    %3 = vector.load %arg3[%c0_3, %c0_4] : memref<512x128xf32, #tpu.memory_space<vmem>>, vector<512x128xf32>
    tpu.vector_store %arg3[%c0_3, %c0_4], %2 {strides = array<i32>} : memref<512x128xf32, #tpu.memory_space<vmem>>, vector<512x128xf32>,
    %cst_5 = arith.constant dense<0.000000e+00> : vector<128xf32>
    %4 = vector.multi_reduction <add>, %2, %cst_5 [0] : vector<512x128xf32> to vector<128xf32>
    %5 = vector.shape_cast %4 : vector<128xf32> to vector<1x128xf32>
    %6 = arith.mulf %2, %2 : vector<512x128xf32>
    %cst_6 = arith.constant dense<0.000000e+00> : vector<128xf32>
    %7 = vector.multi_reduction <add>, %6, %cst_6 [0] : vector<512x128xf32> to vector<128xf32>
    %8 = vector.shape_cast %7 : vector<128xf32> to vector<1x128xf32>
    %9 = tpu.iota {dimensions = array<i32: 0>} : vector<8x128xi32>
    %c0_i32 = arith.constant 0 : i32
    %10 = vector.broadcast %c0_i32 : i32 to vector<8x128xi32>
    %11 = arith.cmpi eq, %9, %10 : vector<8x128xi32>
    %c1_i32 = arith.constant 1 : i32
    %12 = vector.broadcast %c1_i32 : i32 to vector<8x128xi32>
    %13 = arith.cmpi eq, %9, %12 : vector<8x128xi32>
    %cst_7 = arith.constant 0.000000e+00 : f32
    %14 = vector.shape_cast %8 : vector<1x128xf32> to vector<1x128xf32>
    %15 = vector.broadcast %14 : vector<1x128xf32> to vector<8x128xf32>
    %16 = vector.broadcast %cst_7 : f32 to vector<8x128xf32>
    %17 = arith.select %13, %15, %16 : vector<8x128xi1>, vector<8x128xf32>
    %18 = vector.shape_cast %5 : vector<1x128xf32> to vector<1x128xf32>
    %19 = vector.broadcast %18 : vector<1x128xf32> to vector<8x128xf32>
    %20 = arith.select %11, %19, %17 : vector<8x128xi1>, vector<8x128xf32>
    %c0_8 = arith.constant 0 : index
    %c0_9 = arith.constant 0 : index
    %21 = vector.load %arg4[%c0_8, %c0_9] : memref<8x128xf32, #tpu.memory_space<vmem>>, vector<8x128xf32>
    tpu.vector_store %arg4[%c0_8, %c0_9], %20 {strides = array<i32>} : memref<8x128xf32, #tpu.memory_space<vmem>>, vector<8x128xf32>,
    return
  }
  func.func @transform_0(%arg0: i32) -> (i32, i32) {
    %c0_i32 = arith.constant 0 : i32
    %c0_i32_0 = arith.constant 0 : i32
    return %arg0, %c0_i32 : i32, i32
  }
  func.func @transform_1(%arg0: i32) -> (i32, i32) {
    %c0_i32 = arith.constant 0 : i32
    %c0_i32_0 = arith.constant 0 : i32
    %c0_i32_1 = arith.constant 0 : i32
    return %c0_i32, %c0_i32_0 : i32, i32
  }
  func.func @transform_2(%arg0: i32) -> (i32, i32) {
    %c0_i32 = arith.constant 0 : i32
    %c0_i32_0 = arith.constant 0 : i32
    return %arg0, %c0_i32 : i32, i32
  }
  func.func @transform_3(%arg0: i32) -> (i32, i32) {
    %c0_i32 = arith.constant 0 : i32
    %c0_i32_0 = arith.constant 0 : i32
    return %arg0, %c0_i32 : i32, i32
  }
}

</mosaic_0001>

<llo_original>
// kernel: tpu_custom_call.1
$region0: #{tpu_custom_call.1}
  #allocation0 [shape = 'u32[]', space=smem, size = 0x4, offset = 0x4, fixed_abs, tag = 'smem constant byte address 0x4 - core index']
  #allocation1 [shape = 'u32[72,128]{1,0:T(1,128)}', space=vmem, size = 0x9000, scoped, tag = 'internal scratch']
  %s0 = inlined_call_operand.vmem [shape: bf16[512,72], index: 0, kind: input, shape index: {}]
  %s1 = inlined_call_operand.vmem [shape: bf16[72,128], index: 1, kind: input, shape index: {}]
  %s2 = inlined_call_operand.hbm [shape: f32[512,128], index: 2, kind: output, shape index: {0}]
  %s3 = inlined_call_operand.hbm [shape: f32[8,128], index: 3, kind: output, shape index: {1}]
  %4 = xla_tuple %s2, %s3
  %s5 = sld [smem:[#allocation0]]
  $region26: #{tpu_custom_call.1} parent=0
    _
  %s7 = ssub.s32 1, %s5
  %s8 = scalar_select 0, %s7, %s5
  $region1: #{tpu_custom_call.1} parent=0
    #allocation2 [shape = 'u8[262144]{0}', space=vmem, size = 0x40000, scoped, tag = 'output window, operand 0, single buffered']
    #allocation3 [shape = 's32[1]{0}', space=sflag, size = 0x4, scoped, tag = 'scoped memory for tpu_custom_call.1']
    #allocation4 [shape = 'u8[4096]{0}', space=vmem, size = 0x1000, scoped, tag = 'output window, operand 1, single buffered']
    #allocation5 [shape = 's32[1]{0}', space=sflag, size = 0x4, scoped, tag = 'scoped memory for tpu_custom_call.1']
    %9 = vsyncpa [#allocation3], 0
    %10 = vsyncpa [#allocation5], 0
    // Predicated region
    $region2: #{tpu_custom_call.1} parent=1 // pred_check
      _
    $region3: #{tpu_custom_call.1} parent=1 // pred_check_branch
      %12 = sbr.rel (0) target = $region5
    $region4: #{tpu_custom_call.1} parent=1 // pred_region
      _
    $region5: #{tpu_custom_call.1} parent=1 // pred_fallthru
      _
    // Predicated region
    $region6: #{tpu_custom_call.1} parent=1 // pred_check
      _
    $region7: #{tpu_custom_call.1} parent=1 // pred_check_branch
      %14 = sbr.rel (0) target = $region9
    $region8: #{tpu_custom_call.1} parent=1 // pred_region
      _
    $region9: #{tpu_custom_call.1} parent=1 // pred_fallthru
      _
    %v16 = vld [vmem:[%s0] sm:$0xf]
    %v17 = vld [vmem:[%s0 + $0x4] sm:$0xf]
    %v18 = vld [vmem:[%s0 + $0x8] sm:$0xf]
    %v19 = vld [vmem:[%s0 + $0xc] sm:$0xf]
    %v20 = vld [vmem:[%s0 + $0x10] sm:$0xf]
    %v21 = vld [vmem:[%s0 + $0x14] sm:$0xf]
    %v22 = vld [vmem:[%s0 + $0x18] sm:$0xf]
    %v23 = vld [vmem:[%s0 + $0x1c] sm:$0xf]
    %v24 = vld [vmem:[%s0 + $0x20] sm:$0xf]
    %v25 = vld [vmem:[%s0 + $0x24] sm:$0xf]
    %v26 = vld [vmem:[%s0 + $0x28] sm:$0xf]
    %v27 = vld [vmem:[%s0 + $0x2c] sm:$0xf]
    %v28 = vld [vmem:[%s0 + $0x30] sm:$0xf]
    %v29 = vld [vmem:[%s0 + $0x34] sm:$0xf]
    %v30 = vld [vmem:[%s0 + $0x38] sm:$0xf]
    %v31 = vld [vmem:[%s0 + $0x3c] sm:$0xf]
    %v32 = vld [vmem:[%s0 + $0x40] sm:$0xf]
    %v33 = vld [vmem:[%s0 + $0x44] sm:$0xf]
    %v34 = vld [vmem:[%s0 + $0x48] sm:$0xf]
    %v35 = vld [vmem:[%s0 + $0x4c] sm:$0xf]
    %v36 = vld [vmem:[%s0 + $0x50] sm:$0xf]
    %v37 = vld [vmem:[%s0 + $0x54] sm:$0xf]
    %v38 = vld [vmem:[%s0 + $0x58] sm:$0xf]
    %v39 = vld [vmem:[%s0 + $0x5c] sm:$0xf]
    %v40 = vld [vmem:[%s0 + $0x60] sm:$0xf]
    %v41 = vld [vmem:[%s0 + $0x64] sm:$0xf]
    %v42 = vld [vmem:[%s0 + $0x68] sm:$0xf]
    %v43 = vld [vmem:[%s0 + $0x6c] sm:$0xf]
    %v44 = vld [vmem:[%s0 + $0x70] sm:$0xf]
    %v45 = vld [vmem:[%s0 + $0x74] sm:$0xf]
    %v46 = vld [vmem:[%s0 + $0x78] sm:$0xf]
    %v47 = vld [vmem:[%s0 + $0x7c] sm:$0xf]
    %v48 = vld [vmem:[%s0 + $0x80] sm:$0xf]
    %v49 = vld [vmem:[%s0 + $0x84] sm:$0xf]
    %v50 = vld [vmem:[%s0 + $0x88] sm:$0xf]
    %v51 = vld [vmem:[%s0 + $0x8c] sm:$0xf]
    %v52 = vld [vmem:[%s0 + $0x90] sm:$0xf]
    %v53 = vld [vmem:[%s0 + $0x94] sm:$0xf]
    %v54 = vld [vmem:[%s0 + $0x98] sm:$0xf]
    %v55 = vld [vmem:[%s0 + $0x9c] sm:$0xf]
    %v56 = vld [vmem:[%s0 + $0xa0] sm:$0xf]
    %v57 = vld [vmem:[%s0 + $0xa4] sm:$0xf]
    %v58 = vld [vmem:[%s0 + $0xa8] sm:$0xf]
    %v59 = vld [vmem:[%s0 + $0xac] sm:$0xf]
    %v60 = vld [vmem:[%s0 + $0xb0] sm:$0xf]
    %v61 = vld [vmem:[%s0 + $0xb4] sm:$0xf]
    %v62 = vld [vmem:[%s0 + $0xb8] sm:$0xf]
    %v63 = vld [vmem:[%s0 + $0xbc] sm:$0xf]
    %v64 = vld [vmem:[%s0 + $0xc0] sm:$0xf]
    %v65 = vld [vmem:[%s0 + $0xc4] sm:$0xf]
    %v66 = vld [vmem:[%s0 + $0xc8] sm:$0xf]
    %v67 = vld [vmem:[%s0 + $0xcc] sm:$0xf]
    %v68 = vld [vmem:[%s0 + $0xd0] sm:$0xf]
    %v69 = vld [vmem:[%s0 + $0xd4] sm:$0xf]
    %v70 = vld [vmem:[%s0 + $0xd8] sm:$0xf]
    %v71 = vld [vmem:[%s0 + $0xdc] sm:$0xf]
    %v72 = vld [vmem:[%s0 + $0xe0] sm:$0xf]
    %v73 = vld [vmem:[%s0 + $0xe4] sm:$0xf]
    %v74 = vld [vmem:[%s0 + $0xe8] sm:$0xf]
    %v75 = vld [vmem:[%s0 + $0xec] sm:$0xf]
    %v76 = vld [vmem:[%s0 + $0xf0] sm:$0xf]
    %v77 = vld [vmem:[%s0 + $0xf4] sm:$0xf]
    %v78 = vld [vmem:[%s0 + $0xf8] sm:$0xf]
    %v79 = vld [vmem:[%s0 + $0xfc] sm:$0xf]
    %v80 = vld [vmem:[%s1] sm:$0xf]
    %v81 = vld [vmem:[%s1 + $0x4] sm:$0xf]
    %v82 = vld [vmem:[%s1 + $0x8] sm:$0xf]
    %v83 = vld [vmem:[%s1 + $0xc] sm:$0xf]
    %v84 = vld [vmem:[%s1 + $0x10] sm:$0xf]
    %v85 = vld [vmem:[%s1 + $0x14] sm:$0xf]
    %v86 = vld [vmem:[%s1 + $0x18] sm:$0xf]
    %v87 = vld [vmem:[%s1 + $0x1c] sm:$0xf]
    %v88 = vld [vmem:[%s1 + $0x20] sm:$0xf]
    %v153 = vunpack.c.l.b16 %v16
    %v154 = vunpack.c.l.b16 %v17
    %v155 = vunpack.c.l.b16 %v18
    %v156 = vunpack.c.l.b16 %v19
    %v157 = vunpack.c.l.b16 %v20
    %v158 = vunpack.c.l.b16 %v21
    %v159 = vunpack.c.l.b16 %v22
    %v160 = vunpack.c.l.b16 %v23
    %v161 = vunpack.c.l.b16 %v24
    %v162 = vunpack.c.l.b16 %v25
    %v163 = vunpack.c.l.b16 %v26
    %v164 = vunpack.c.l.b16 %v27
    %v165 = vunpack.c.l.b16 %v28
    %v166 = vunpack.c.l.b16 %v29
    %v167 = vunpack.c.l.b16 %v30
    %v168 = vunpack.c.l.b16 %v31
    %v169 = vunpack.c.l.b16 %v32
    %v170 = vunpack.c.l.b16 %v33
    %v171 = vunpack.c.l.b16 %v34
    %v172 = vunpack.c.l.b16 %v35
    %v173 = vunpack.c.l.b16 %v36
    %v174 = vunpack.c.l.b16 %v37
    %v175 = vunpack.c.l.b16 %v38
    %v176 = vunpack.c.l.b16 %v39
    %v177 = vunpack.c.l.b16 %v40
    %v178 = vunpack.c.l.b16 %v41
    %v179 = vunpack.c.l.b16 %v42
    %v180 = vunpack.c.l.b16 %v43
    %v181 = vunpack.c.l.b16 %v44
    %v182 = vunpack.c.l.b16 %v45
    %v183 = vunpack.c.l.b16 %v46
    %v184 = vunpack.c.l.b16 %v47
    %v185 = vunpack.c.l.b16 %v48
    %v186 = vunpack.c.l.b16 %v49
    %v187 = vunpack.c.l.b16 %v50
    %v188 = vunpack.c.l.b16 %v51
    %v189 = vunpack.c.l.b16 %v52
    %v190 = vunpack.c.l.b16 %v53
    %v191 = vunpack.c.l.b16 %v54
    %v192 = vunpack.c.l.b16 %v55
    %v193 = vunpack.c.l.b16 %v56
    %v194 = vunpack.c.l.b16 %v57
    %v195 = vunpack.c.l.b16 %v58
    %v196 = vunpack.c.l.b16 %v59
    %v197 = vunpack.c.l.b16 %v60
    %v198 = vunpack.c.l.b16 %v61
    %v199 = vunpack.c.l.b16 %v62
    %v200 = vunpack.c.l.b16 %v63
    %v201 = vunpack.c.l.b16 %v64
    %v202 = vunpack.c.l.b16 %v65
    %v203 = vunpack.c.l.b16 %v66
    %v204 = vunpack.c.l.b16 %v67
    %v205 = vunpack.c.l.b16 %v68
    %v206 = vunpack.c.l.b16 %v69
    %v207 = vunpack.c.l.b16 %v70
    %v208 = vunpack.c.l.b16 %v71
    %v209 = vunpack.c.l.b16 %v72
    %v210 = vunpack.c.l.b16 %v73
    %v211 = vunpack.c.l.b16 %v74
    %v212 = vunpack.c.l.b16 %v75
    %v213 = vunpack.c.l.b16 %v76
    %v214 = vunpack.c.l.b16 %v77
    %v215 = vunpack.c.l.b16 %v78
    %v216 = vunpack.c.l.b16 %v79
    %v217 = vpack.c.b16 %v154, %v153
    %v218 = vpack.c.b16 %v156, %v155
    %v219 = vpack.c.b16 %v158, %v157
    %v220 = vpack.c.b16 %v160, %v159
    %v221 = vpack.c.b16 %v162, %v161
    %v222 = vpack.c.b16 %v164, %v163
    %v223 = vpack.c.b16 %v166, %v165
    %v224 = vpack.c.b16 %v168, %v167
    %v225 = vpack.c.b16 %v170, %v169
    %v226 = vpack.c.b16 %v172, %v171
    %v227 = vpack.c.b16 %v174, %v173
    %v228 = vpack.c.b16 %v176, %v175
    %v229 = vpack.c.b16 %v178, %v177
    %v230 = vpack.c.b16 %v180, %v179
    %v231 = vpack.c.b16 %v182, %v181
    %v232 = vpack.c.b16 %v184, %v183
    %v233 = vpack.c.b16 %v186, %v185
    %v234 = vpack.c.b16 %v188, %v187
    %v235 = vpack.c.b16 %v190, %v189
    %v236 = vpack.c.b16 %v192, %v191
    %v237 = vpack.c.b16 %v194, %v193
    %v238 = vpack.c.b16 %v196, %v195
    %v239 = vpack.c.b16 %v198, %v197
    %v240 = vpack.c.b16 %v200, %v199
    %v241 = vpack.c.b16 %v202, %v201
    %v242 = vpack.c.b16 %v204, %v203
    %v243 = vpack.c.b16 %v206, %v205
    %v244 = vpack.c.b16 %v208, %v207
    %v245 = vpack.c.b16 %v210, %v209
    %v246 = vpack.c.b16 %v212, %v211
    %v247 = vpack.c.b16 %v214, %v213
    %v248 = vpack.c.b16 %v216, %v215
    %v258 = vunpack.c.l.b16 %v80
    %v259 = vunpack.c.l.b16 %v81
    %v260 = vunpack.c.l.b16 %v82
    %v261 = vunpack.c.l.b16 %v83
    %v262 = vunpack.c.l.b16 %v84
    %v263 = vunpack.c.l.b16 %v85
    %v264 = vunpack.c.l.b16 %v86
    %v265 = vunpack.c.l.b16 %v87
    %v266 = vunpack.c.l.b16 %v88
    %v267 = vpack.c.b16 %v259, %v258
    %v268 = vpack.c.b16 %v261, %v260
    %v269 = vpack.c.b16 %v263, %v262
    %v270 = vpack.c.b16 %v265, %v264
    %v271 = vpack.c.b16 %v266, %v266
    %vm276 = vcmask 588800
    %v278 = vsel %vm276, %v217, 0
    %v281 = vsel %vm276, %v218, 0
    %v284 = vsel %vm276, %v219, 0
    %v287 = vsel %vm276, %v220, 0
    %v290 = vsel %vm276, %v221, 0
    %v293 = vsel %vm276, %v222, 0
    %v296 = vsel %vm276, %v223, 0
    %v299 = vsel %vm276, %v224, 0
    %v302 = vsel %vm276, %v225, 0
    %v305 = vsel %vm276, %v226, 0
    %v308 = vsel %vm276, %v227, 0
    %v311 = vsel %vm276, %v228, 0
    %v314 = vsel %vm276, %v229, 0
    %v317 = vsel %vm276, %v230, 0
    %v320 = vsel %vm276, %v231, 0
    %v323 = vsel %vm276, %v232, 0
    %v326 = vsel %vm276, %v233, 0
    %v329 = vsel %vm276, %v234, 0
    %v332 = vsel %vm276, %v235, 0
    %v335 = vsel %vm276, %v236, 0
    %v338 = vsel %vm276, %v237, 0
    %v341 = vsel %vm276, %v238, 0
    %v344 = vsel %vm276, %v239, 0
    %v347 = vsel %vm276, %v240, 0
    %v350 = vsel %vm276, %v241, 0
    %v353 = vsel %vm276, %v242, 0
    %v356 = vsel %vm276, %v243, 0
    %v359 = vsel %vm276, %v244, 0
    %v362 = vsel %vm276, %v245, 0
    %v365 = vsel %vm276, %v246, 0
    %v368 = vsel %vm276, %v247, 0
    %v371 = vsel %vm276, %v248, 0
    %vm373 = vcmask 1043456
    %v375 = vsel %vm373, %v271, 0
    %377 = vmatpush.bf16.msra.mxu0 0
    %378 = vmatpush.bf16.msra.mxu0 0
    %379 = vmatpush.bf16.msra.mxu0 0
    %380 = vmatpush.bf16.msra.mxu0 %v375
    %381 = vmatpush.bf16.msra.mxu0 %v270
    %382 = vmatpush.bf16.msra.mxu0 %v269
    %383 = vmatpush.bf16.msra.mxu0 %v268
    %384 = vmatpush.bf16.msra.mxu0 %v267
    %385 = vmatmul.bf16.gmra.mxu0 %v278
    %v386 = vpop.f32.mrf.mxu0
    %v387 = vadd.f32 0.0, %v386
    %v388 = vpop.f32.mrf.mxu0
    %v389 = vadd.f32 0.0, %v388
    %390 = vmatmul.bf16.gmra.mxu0 %v281
    %v391 = vpop.f32.mrf.mxu0
    %v392 = vadd.f32 0.0, %v391
    %v393 = vpop.f32.mrf.mxu0
    %v394 = vadd.f32 0.0, %v393
    %395 = vmatmul.bf16.gmra.mxu0 %v284
    %v396 = vpop.f32.mrf.mxu0
    %v397 = vadd.f32 0.0, %v396
    %v398 = vpop.f32.mrf.mxu0
    %v399 = vadd.f32 0.0, %v398
    %400 = vmatmul.bf16.gmra.mxu0 %v287
    %v401 = vpop.f32.mrf.mxu0
    %v402 = vadd.f32 0.0, %v401
    %v403 = vpop.f32.mrf.mxu0
    %v404 = vadd.f32 0.0, %v403
    %405 = vmatmul.bf16.gmra.mxu0 %v290
    %v406 = vpop.f32.mrf.mxu0
    %v407 = vadd.f32 0.0, %v406
    %v408 = vpop.f32.mrf.mxu0
    %v409 = vadd.f32 0.0, %v408
    %410 = vmatmul.bf16.gmra.mxu0 %v293
    %v411 = vpop.f32.mrf.mxu0
    %v412 = vadd.f32 0.0, %v411
    %v413 = vpop.f32.mrf.mxu0
    %v414 = vadd.f32 0.0, %v413
    %415 = vmatmul.bf16.gmra.mxu0 %v296
    %v416 = vpop.f32.mrf.mxu0
    %v417 = vadd.f32 0.0, %v416
    %v418 = vpop.f32.mrf.mxu0
    %v419 = vadd.f32 0.0, %v418
    %420 = vmatmul.bf16.gmra.mxu0 %v299
    %v421 = vpop.f32.mrf.mxu0
    %v422 = vadd.f32 0.0, %v421
    %v423 = vpop.f32.mrf.mxu0
    %v424 = vadd.f32 0.0, %v423
    %425 = vmatmul.bf16.gmra.mxu0 %v302
    %v426 = vpop.f32.mrf.mxu0
    %v427 = vadd.f32 0.0, %v426
    %v428 = vpop.f32.mrf.mxu0
    %v429 = vadd.f32 0.0, %v428
    %430 = vmatmul.bf16.gmra.mxu0 %v305
    %v431 = vpop.f32.mrf.mxu0
    %v432 = vadd.f32 0.0, %v431
    %v433 = vpop.f32.mrf.mxu0
    %v434 = vadd.f32 0.0, %v433
    %435 = vmatmul.bf16.gmra.mxu0 %v308
    %v436 = vpop.f32.mrf.mxu0
    %v437 = vadd.f32 0.0, %v436
    %v438 = vpop.f32.mrf.mxu0
    %v439 = vadd.f32 0.0, %v438
    %440 = vmatmul.bf16.gmra.mxu0 %v311
    %v441 = vpop.f32.mrf.mxu0
    %v442 = vadd.f32 0.0, %v441
    %v443 = vpop.f32.mrf.mxu0
    %v444 = vadd.f32 0.0, %v443
    %445 = vmatmul.bf16.gmra.mxu0 %v314
    %v446 = vpop.f32.mrf.mxu0
    %v447 = vadd.f32 0.0, %v446
    %v448 = vpop.f32.mrf.mxu0
    %v449 = vadd.f32 0.0, %v448
    %450 = vmatmul.bf16.gmra.mxu0 %v317
    %v451 = vpop.f32.mrf.mxu0
    %v452 = vadd.f32 0.0, %v451
    %v453 = vpop.f32.mrf.mxu0
    %v454 = vadd.f32 0.0, %v453
    %455 = vmatmul.bf16.gmra.mxu0 %v320
    %v456 = vpop.f32.mrf.mxu0
    %v457 = vadd.f32 0.0, %v456
    %v458 = vpop.f32.mrf.mxu0
    %v459 = vadd.f32 0.0, %v458
    %460 = vmatmul.bf16.gmra.mxu0 %v323
    %v461 = vpop.f32.mrf.mxu0
    %v462 = vadd.f32 0.0, %v461
    %v463 = vpop.f32.mrf.mxu0
    %v464 = vadd.f32 0.0, %v463
    %465 = vmatmul.bf16.gmra.mxu0 %v326
    %v466 = vpop.f32.mrf.mxu0
    %v467 = vadd.f32 0.0, %v466
    %v468 = vpop.f32.mrf.mxu0
    %v469 = vadd.f32 0.0, %v468
    %470 = vmatmul.bf16.gmra.mxu0 %v329
    %v471 = vpop.f32.mrf.mxu0
    %v472 = vadd.f32 0.0, %v471
    %v473 = vpop.f32.mrf.mxu0
    %v474 = vadd.f32 0.0, %v473
    %475 = vmatmul.bf16.gmra.mxu0 %v332
    %v476 = vpop.f32.mrf.mxu0
    %v477 = vadd.f32 0.0, %v476
    %v478 = vpop.f32.mrf.mxu0
    %v479 = vadd.f32 0.0, %v478
    %480 = vmatmul.bf16.gmra.mxu0 %v335
    %v481 = vpop.f32.mrf.mxu0
    %v482 = vadd.f32 0.0, %v481
    %v483 = vpop.f32.mrf.mxu0
    %v484 = vadd.f32 0.0, %v483
    %485 = vmatmul.bf16.gmra.mxu0 %v338
    %v486 = vpop.f32.mrf.mxu0
    %v487 = vadd.f32 0.0, %v486
    %v488 = vpop.f32.mrf.mxu0
    %v489 = vadd.f32 0.0, %v488
    %490 = vmatmul.bf16.gmra.mxu0 %v341
    %v491 = vpop.f32.mrf.mxu0
    %v492 = vadd.f32 0.0, %v491
    %v493 = vpop.f32.mrf.mxu0
    %v494 = vadd.f32 0.0, %v493
    %495 = vmatmul.bf16.gmra.mxu0 %v344
    %v496 = vpop.f32.mrf.mxu0
    %v497 = vadd.f32 0.0, %v496
    %v498 = vpop.f32.mrf.mxu0
    %v499 = vadd.f32 0.0, %v498
    %500 = vmatmul.bf16.gmra.mxu0 %v347
    %v501 = vpop.f32.mrf.mxu0
    %v502 = vadd.f32 0.0, %v501
    %v503 = vpop.f32.mrf.mxu0
    %v504 = vadd.f32 0.0, %v503
    %505 = vmatmul.bf16.gmra.mxu0 %v350
    %v506 = vpop.f32.mrf.mxu0
    %v507 = vadd.f32 0.0, %v506
    %v508 = vpop.f32.mrf.mxu0
    %v509 = vadd.f32 0.0, %v508
    %510 = vmatmul.bf16.gmra.mxu0 %v353
    %v511 = vpop.f32.mrf.mxu0
    %v512 = vadd.f32 0.0, %v511
    %v513 = vpop.f32.mrf.mxu0
    %v514 = vadd.f32 0.0, %v513
    %515 = vmatmul.bf16.gmra.mxu0 %v356
    %v516 = vpop.f32.mrf.mxu0
    %v517 = vadd.f32 0.0, %v516
    %v518 = vpop.f32.mrf.mxu0
    %v519 = vadd.f32 0.0, %v518
    %520 = vmatmul.bf16.gmra.mxu0 %v359
    %v521 = vpop.f32.mrf.mxu0
    %v522 = vadd.f32 0.0, %v521
    %v523 = vpop.f32.mrf.mxu0
    %v524 = vadd.f32 0.0, %v523
    %525 = vmatmul.bf16.gmra.mxu0 %v362
    %v526 = vpop.f32.mrf.mxu0
    %v527 = vadd.f32 0.0, %v526
    %v528 = vpop.f32.mrf.mxu0
    %v529 = vadd.f32 0.0, %v528
    %530 = vmatmul.bf16.gmra.mxu0 %v365
    %v531 = vpop.f32.mrf.mxu0
    %v532 = vadd.f32 0.0, %v531
    %v533 = vpop.f32.mrf.mxu0
    %v534 = vadd.f32 0.0, %v533
    %535 = vmatmul.bf16.gmra.mxu0 %v368
    %v536 = vpop.f32.mrf.mxu0
    %v537 = vadd.f32 0.0, %v536
    %v538 = vpop.f32.mrf.mxu0
    %v539 = vadd.f32 0.0, %v538
    %540 = vmatmul.bf16.gmra.mxu0 %v371
    %v541 = vpop.f32.mrf.mxu0
    %v542 = vadd.f32 0.0, %v541
    %v543 = vpop.f32.mrf.mxu0
    %v544 = vadd.f32 0.0, %v543
    %545 = vdwg.mxu0
    %546 = vst [vmem:[#allocation2] sm:$0xff] %v387
    %547 = vst [vmem:[#allocation2 + $0x8] sm:$0xff] %v389
    %548 = vst [vmem:[#allocation2 + $0x10] sm:$0xff] %v392
    %549 = vst [vmem:[#allocation2 + $0x18] sm:$0xff] %v394
    %550 = vst [vmem:[#allocation2 + $0x20] sm:$0xff] %v397
    %551 = vst [vmem:[#allocation2 + $0x28] sm:$0xff] %v399
    %552 = vst [vmem:[#allocation2 + $0x30] sm:$0xff] %v402
    %553 = vst [vmem:[#allocation2 + $0x38] sm:$0xff] %v404
    %554 = vst [vmem:[#allocation2 + $0x40] sm:$0xff] %v407
    %555 = vst [vmem:[#allocation2 + $0x48] sm:$0xff] %v409
    %556 = vst [vmem:[#allocation2 + $0x50] sm:$0xff] %v412
    %557 = vst [vmem:[#allocation2 + $0x58] sm:$0xff] %v414
    %558 = vst [vmem:[#allocation2 + $0x60] sm:$0xff] %v417
    %559 = vst [vmem:[#allocation2 + $0x68] sm:$0xff] %v419
    %560 = vst [vmem:[#allocation2 + $0x70] sm:$0xff] %v422
    %561 = vst [vmem:[#allocation2 + $0x78] sm:$0xff] %v424
    %562 = vst [vmem:[#allocation2 + $0x80] sm:$0xff] %v427
    %563 = vst [vmem:[#allocation2 + $0x88] sm:$0xff] %v429
    %564 = vst [vmem:[#allocation2 + $0x90] sm:$0xff] %v432
    %565 = vst [vmem:[#allocation2 + $0x98] sm:$0xff] %v434
    %566 = vst [vmem:[#allocation2 + $0xa0] sm:$0xff] %v437
    %567 = vst [vmem:[#allocation2 + $0xa8] sm:$0xff] %v439
    %568 = vst [vmem:[#allocation2 + $0xb0] sm:$0xff] %v442
    %569 = vst [vmem:[#allocation2 + $0xb8] sm:$0xff] %v444
    %570 = vst [vmem:[#allocation2 + $0xc0] sm:$0xff] %v447
    %571 = vst [vmem:[#allocation2 + $0xc8] sm:$0xff] %v449
    %572 = vst [vmem:[#allocation2 + $0xd0] sm:$0xff] %v452
    %573 = vst [vmem:[#allocation2 + $0xd8] sm:$0xff] %v454
    %574 = vst [vmem:[#allocation2 + $0xe0] sm:$0xff] %v457
    %575 = vst [vmem:[#allocation2 + $0xe8] sm:$0xff] %v459
    %576 = vst [vmem:[#allocation2 + $0xf0] sm:$0xff] %v462
    %577 = vst [vmem:[#allocation2 + $0xf8] sm:$0xff] %v464
    %578 = vst [vmem:[#allocation2 + $0x100] sm:$0xff] %v467
    %579 = vst [vmem:[#allocation2 + $0x108] sm:$0xff] %v469
    %580 = vst [vmem:[#allocation2 + $0x110] sm:$0xff] %v472
    %581 = vst [vmem:[#allocation2 + $0x118] sm:$0xff] %v474
    %582 = vst [vmem:[#allocation2 + $0x120] sm:$0xff] %v477
    %583 = vst [vmem:[#allocation2 + $0x128] sm:$0xff] %v479
    %584 = vst [vmem:[#allocation2 + $0x130] sm:$0xff] %v482
    %585 = vst [vmem:[#allocation2 + $0x138] sm:$0xff] %v484
    %586 = vst [vmem:[#allocation2 + $0x140] sm:$0xff] %v487
    %587 = vst [vmem:[#allocation2 + $0x148] sm:$0xff] %v489
    %588 = vst [vmem:[#allocation2 + $0x150] sm:$0xff] %v492
    %589 = vst [vmem:[#allocation2 + $0x158] sm:$0xff] %v494
    %590 = vst [vmem:[#allocation2 + $0x160] sm:$0xff] %v497
    %591 = vst [vmem:[#allocation2 + $0x168] sm:$0xff] %v499
    %592 = vst [vmem:[#allocation2 + $0x170] sm:$0xff] %v502
    %593 = vst [vmem:[#allocation2 + $0x178] sm:$0xff] %v504
    %594 = vst [vmem:[#allocation2 + $0x180] sm:$0xff] %v507
    %595 = vst [vmem:[#allocation2 + $0x188] sm:$0xff] %v509
    %596 = vst [vmem:[#allocation2 + $0x190] sm:$0xff] %v512
    %597 = vst [vmem:[#allocation2 + $0x198] sm:$0xff] %v514
    %598 = vst [vmem:[#allocation2 + $0x1a0] sm:$0xff] %v517
    %599 = vst [vmem:[#allocation2 + $0x1a8] sm:$0xff] %v519
    %600 = vst [vmem:[#allocation2 + $0x1b0] sm:$0xff] %v522
    %601 = vst [vmem:[#allocation2 + $0x1b8] sm:$0xff] %v524
    %602 = vst [vmem:[#allocation2 + $0x1c0] sm:$0xff] %v527
    %603 = vst [vmem:[#allocation2 + $0x1c8] sm:$0xff] %v529
    %604 = vst [vmem:[#allocation2 + $0x1d0] sm:$0xff] %v532
    %605 = vst [vmem:[#allocation2 + $0x1d8] sm:$0xff] %v534
    %606 = vst [vmem:[#allocation2 + $0x1e0] sm:$0xff] %v537
    %607 = vst [vmem:[#allocation2 + $0x1e8] sm:$0xff] %v539
    %608 = vst [vmem:[#allocation2 + $0x1f0] sm:$0xff] %v542
    %609 = vst [vmem:[#allocation2 + $0x1f8] sm:$0xff] %v544
    %v610 = vadd.f32 %v387, %v389
    %v611 = vadd.f32 %v610, %v392
    %v612 = vadd.f32 %v611, %v394
    %v613 = vadd.f32 %v612, %v397
    %v614 = vadd.f32 %v613, %v399
    %v615 = vadd.f32 %v614, %v402
    %v616 = vadd.f32 %v615, %v404
    %v617 = vadd.f32 %v616, %v407
    %v618 = vadd.f32 %v617, %v409
    %v619 = vadd.f32 %v618, %v412
    %v620 = vadd.f32 %v619, %v414
    %v621 = vadd.f32 %v620, %v417
    %v622 = vadd.f32 %v621, %v419
    %v623 = vadd.f32 %v622, %v422
    %v624 = vadd.f32 %v623, %v424
    %v625 = vadd.f32 %v624, %v427
    %v626 = vadd.f32 %v625, %v429
    %v627 = vadd.f32 %v626, %v432
    %v628 = vadd.f32 %v627, %v434
    %v629 = vadd.f32 %v628, %v437
    %v630 = vadd.f32 %v629, %v439
    %v631 = vadd.f32 %v630, %v442
    %v632 = vadd.f32 %v631, %v444
    %v633 = vadd.f32 %v632, %v447
    %v634 = vadd.f32 %v633, %v449
    %v635 = vadd.f32 %v634, %v452
    %v636 = vadd.f32 %v635, %v454
    %v637 = vadd.f32 %v636, %v457
    %v638 = vadd.f32 %v637, %v459
    %v639 = vadd.f32 %v638, %v462
    %v640 = vadd.f32 %v639, %v464
    %v641 = vadd.f32 %v640, %v467
    %v642 = vadd.f32 %v641, %v469
    %v643 = vadd.f32 %v642, %v472
    %v644 = vadd.f32 %v643, %v474
    %v645 = vadd.f32 %v644, %v477
    %v646 = vadd.f32 %v645, %v479
    %v647 = vadd.f32 %v646, %v482
    %v648 = vadd.f32 %v647, %v484
    %v649 = vadd.f32 %v648, %v487
    %v650 = vadd.f32 %v649, %v489
    %v651 = vadd.f32 %v650, %v492
    %v652 = vadd.f32 %v651, %v494
    %v653 = vadd.f32 %v652, %v497
    %v654 = vadd.f32 %v653, %v499
    %v655 = vadd.f32 %v654, %v502
    %v656 = vadd.f32 %v655, %v504
    %v657 = vadd.f32 %v656, %v507
    %v658 = vadd.f32 %v657, %v509
    %v659 = vadd.f32 %v658, %v512
    %v660 = vadd.f32 %v659, %v514
    %v661 = vadd.f32 %v660, %v517
    %v662 = vadd.f32 %v661, %v519
    %v663 = vadd.f32 %v662, %v522
    %v664 = vadd.f32 %v663, %v524
    %v665 = vadd.f32 %v664, %v527
    %v666 = vadd.f32 %v665, %v529
    %v667 = vadd.f32 %v666, %v532
    %v668 = vadd.f32 %v667, %v534
    %v669 = vadd.f32 %v668, %v537
    %v670 = vadd.f32 %v669, %v539
    %v671 = vadd.f32 %v670, %v542
    %v672 = vadd.f32 %v671, %v544
    %v673 = vrot.slane %v672, 4
    %v674 = vadd.f32 %v672, %v673
    %v675 = vrot.slane %v674, 2
    %v676 = vadd.f32 %v674, %v675
    %v677 = vrot.slane %v676, 1
    %v678 = vadd.f32 %v676, %v677
    %v679 = vmul.f32 %v387, %v387
    %v680 = vmul.f32 %v389, %v389
    %v681 = vmul.f32 %v392, %v392
    %v682 = vmul.f32 %v394, %v394
    %v683 = vmul.f32 %v397, %v397
    %v684 = vmul.f32 %v399, %v399
    %v685 = vmul.f32 %v402, %v402
    %v686 = vmul.f32 %v404, %v404
    %v687 = vmul.f32 %v407, %v407
    %v688 = vmul.f32 %v409, %v409
    %v689 = vmul.f32 %v412, %v412
    %v690 = vmul.f32 %v414, %v414
    %v691 = vmul.f32 %v417, %v417
    %v692 = vmul.f32 %v419, %v419
    %v693 = vmul.f32 %v422, %v422
    %v694 = vmul.f32 %v424, %v424
    %v695 = vmul.f32 %v427, %v427
    %v696 = vmul.f32 %v429, %v429
    %v697 = vmul.f32 %v432, %v432
    %v698 = vmul.f32 %v434, %v434
    %v699 = vmul.f32 %v437, %v437
    %v700 = vmul.f32 %v439, %v439
    %v701 = vmul.f32 %v442, %v442
    %v702 = vmul.f32 %v444, %v444
    %v703 = vmul.f32 %v447, %v447
    %v704 = vmul.f32 %v449, %v449
    %v705 = vmul.f32 %v452, %v452
    %v706 = vmul.f32 %v454, %v454
    %v707 = vmul.f32 %v457, %v457
    %v708 = vmul.f32 %v459, %v459
    %v709 = vmul.f32 %v462, %v462
    %v710 = vmul.f32 %v464, %v464
    %v711 = vmul.f32 %v467, %v467
    %v712 = vmul.f32 %v469, %v469
    %v713 = vmul.f32 %v472, %v472
    %v714 = vmul.f32 %v474, %v474
    %v715 = vmul.f32 %v477, %v477
    %v716 = vmul.f32 %v479, %v479
    %v717 = vmul.f32 %v482, %v482
    %v718 = vmul.f32 %v484, %v484
    %v719 = vmul.f32 %v487, %v487
    %v720 = vmul.f32 %v489, %v489
    %v721 = vmul.f32 %v492, %v492
    %v722 = vmul.f32 %v494, %v494
    %v723 = vmul.f32 %v497, %v497
    %v724 = vmul.f32 %v499, %v499
    %v725 = vmul.f32 %v502, %v502
    %v726 = vmul.f32 %v504, %v504
    %v727 = vmul.f32 %v507, %v507
    %v728 = vmul.f32 %v509, %v509
    %v729 = vmul.f32 %v512, %v512
    %v730 = vmul.f32 %v514, %v514
    %v731 = vmul.f32 %v517, %v517
    %v732 = vmul.f32 %v519, %v519
    %v733 = vmul.f32 %v522, %v522
    %v734 = vmul.f32 %v524, %v524
    %v735 = vmul.f32 %v527, %v527
    %v736 = vmul.f32 %v529, %v529
    %v737 = vmul.f32 %v532, %v532
    %v738 = vmul.f32 %v534, %v534
    %v739 = vmul.f32 %v537, %v537
    %v740 = vmul.f32 %v539, %v539
    %v741 = vmul.f32 %v542, %v542
    %v742 = vmul.f32 %v544, %v544
    %v743 = vadd.f32 %v679, %v680
    %v744 = vadd.f32 %v743, %v681
    %v745 = vadd.f32 %v744, %v682
    %v746 = vadd.f32 %v745, %v683
    %v747 = vadd.f32 %v746, %v684
    %v748 = vadd.f32 %v747, %v685
    %v749 = vadd.f32 %v748, %v686
    %v750 = vadd.f32 %v749, %v687
    %v751 = vadd.f32 %v750, %v688
    %v752 = vadd.f32 %v751, %v689
    %v753 = vadd.f32 %v752, %v690
    %v754 = vadd.f32 %v753, %v691
    %v755 = vadd.f32 %v754, %v692
    %v756 = vadd.f32 %v755, %v693
    %v757 = vadd.f32 %v756, %v694
    %v758 = vadd.f32 %v757, %v695
    %v759 = vadd.f32 %v758, %v696
    %v760 = vadd.f32 %v759, %v697
    %v761 = vadd.f32 %v760, %v698
    %v762 = vadd.f32 %v761, %v699
    %v763 = vadd.f32 %v762, %v700
    %v764 = vadd.f32 %v763, %v701
    %v765 = vadd.f32 %v764, %v702
    %v766 = vadd.f32 %v765, %v703
    %v767 = vadd.f32 %v766, %v704
    %v768 = vadd.f32 %v767, %v705
    %v769 = vadd.f32 %v768, %v706
    %v770 = vadd.f32 %v769, %v707
    %v771 = vadd.f32 %v770, %v708
    %v772 = vadd.f32 %v771, %v709
    %v773 = vadd.f32 %v772, %v710
    %v774 = vadd.f32 %v773, %v711
    %v775 = vadd.f32 %v774, %v712
    %v776 = vadd.f32 %v775, %v713
    %v777 = vadd.f32 %v776, %v714
    %v778 = vadd.f32 %v777, %v715
    %v779 = vadd.f32 %v778, %v716
    %v780 = vadd.f32 %v779, %v717
    %v781 = vadd.f32 %v780, %v718
    %v782 = vadd.f32 %v781, %v719
    %v783 = vadd.f32 %v782, %v720
    %v784 = vadd.f32 %v783, %v721
    %v785 = vadd.f32 %v784, %v722
    %v786 = vadd.f32 %v785, %v723
    %v787 = vadd.f32 %v786, %v724
    %v788 = vadd.f32 %v787, %v725
    %v789 = vadd.f32 %v788, %v726
    %v790 = vadd.f32 %v789, %v727
    %v791 = vadd.f32 %v790, %v728
    %v792 = vadd.f32 %v791, %v729
    %v793 = vadd.f32 %v792, %v730
    %v794 = vadd.f32 %v793, %v731
    %v795 = vadd.f32 %v794, %v732
    %v796 = vadd.f32 %v795, %v733
    %v797 = vadd.f32 %v796, %v734
    %v798 = vadd.f32 %v797, %v735
    %v799 = vadd.f32 %v798, %v736
    %v800 = vadd.f32 %v799, %v737
    %v801 = vadd.f32 %v800, %v738
    %v802 = vadd.f32 %v801, %v739
    %v803 = vadd.f32 %v802, %v740
    %v804 = vadd.f32 %v803, %v741
    %v805 = vadd.f32 %v804, %v742
    %v806 = vrot.slane %v805, 4
    %v807 = vadd.f32 %v805, %v806
    %v808 = vrot.slane %v807, 2
    %v809 = vadd.f32 %v807, %v808
    %v810 = vrot.slane %v809, 1
    %v811 = vadd.f32 %v809, %v810
    %v812 = vlaneseq
    %v813 = vshrl.u32 %v812, 7
    %vm814 = vcmp.eq.s32.totalorder %v813, 0
    %vm815 = vcmp.eq.s32.totalorder %v813, 1
    %v816 = vsel %vm815, %v811, 0.0
    %v817 = vsel %vm814, %v678, %v816
    %818 = vst [vmem:[#allocation4] sm:$0xff] %v817
    // Predicated region
    $region10: #{tpu_custom_call.1} parent=1 // pred_check
      _
    $region11: #{tpu_custom_call.1} parent=1 // pred_check_branch
      %820 = sbr.rel (0) target = $region13
    $region12: #{tpu_custom_call.1} parent=1 // pred_region
      %822 = vsyncadd [#allocation3], 0
      %s823 = sshll.u32 [#allocation2], 4
      %s824 = int_to_ptr.vmem [resolvable:$true] %s823
      %s825 = sshll.u32 %s2, 4
      %s826 = int_to_ptr.hbm [resolvable:$true] %s825
      %831 = dma.vmem_to_hbm [thread:$0]  %s824, 8192, %s826, [#allocation3], 128, 128, 8
    $region13: #{tpu_custom_call.1} parent=1 // pred_fallthru
      _
    // Predicated region
    $region14: #{tpu_custom_call.1} parent=1 // pred_check
      _
    $region15: #{tpu_custom_call.1} parent=1 // pred_check_branch
      %833 = sbr.rel (0) target = $region17
    $region16: #{tpu_custom_call.1} parent=1 // pred_region
      %835 = vsyncadd [#allocation5], 0
      %s837 = sshll.u32 [#allocation4], 4
      %s838 = int_to_ptr.vmem [resolvable:$true] %s837
      %s839 = sshll.u32 %s3, 4
      %s840 = int_to_ptr.hbm [resolvable:$true] %s839
      %842 = dma.vmem_to_hbm [thread:$0]  %s838, 128, %s840, [#allocation5]
    $region17: #{tpu_custom_call.1} parent=1 // pred_fallthru
      _
    // Predicated region
    $region18: #{tpu_custom_call.1} parent=1 // pred_check
      _
    $region19: #{tpu_custom_call.1} parent=1 // pred_check_branch
      %844 = sbr.rel (0) target = $region21
    $region20: #{tpu_custom_call.1} parent=1 // pred_region
      %846 = dma.done [#allocation3], 8192
    $region21: #{tpu_custom_call.1} parent=1 // pred_fallthru
      _
    // Predicated region
    $region22: #{tpu_custom_call.1} parent=1 // pred_check
      _
    $region23: #{tpu_custom_call.1} parent=1 // pred_check_branch
      %848 = sbr.rel (0) target = $region25
    $region24: #{tpu_custom_call.1} parent=1 // pred_region
      %850 = dma.done [#allocation5], 128
    $region25: #{tpu_custom_call.1} parent=1 // pred_fallthru
      _
    %851 = vsyncpa [#allocation3], 1
    %852 = vsyncpa [#allocation5], 1

</llo_original>
